<compile_context>
chip_gen: v7x
topology: tpu7x:2x2x1
jax: 0.10.0
libtpu: 0.0.40
codegen_flags: <defaults>
</compile_context>

<pallas_src>
import numpy as np
import jax
import jax.numpy as jnp
from jax.experimental import pallas as pl
from jax.experimental.pallas import tpu as pltpu

VOCAB = 128     # vocab_size
D_MODEL = 128   # d_model (multiple of 128 -> lane-dense, unmasked output stores)
BATCH = 2
SEQ = 8

_TOKENS_PER_STEP = 8                         # sublane-aligned token block for gather path
_ONEHOT_TABLE_BYTES_MAX = 4 * 1024 * 1024    # bf16 table must fit trivially in VMEM


# --------------------------------------------------------------------------------------
# Path 1: tiny tables -- one-hot @ table on the MXU (bf16 operands, f32 accumulate).
# --------------------------------------------------------------------------------------
def _onehot_embed_kernel(idx_ref, table_ref, out_ref):
    # idx_ref:   (N, 1) int32    token ids
    # table_ref: (V, D) bfloat16 full embedding table (VMEM resident, single step)
    # out_ref:   (N, D) float32  gathered embeddings
    idx = idx_ref[...]                                              # (N, 1)
    n_tok = idx.shape[0]
    vocab = table_ref.shape[0]
    # (N, V) one-hot selector built on the VPU; 0/1 are exact in bf16, so the bf16 MXU
    # contraction reproduces the table rows exactly.
    vocab_ids = jax.lax.broadcasted_iota(jnp.int32, (n_tok, vocab), 1)
    onehot = (vocab_ids == idx).astype(jnp.bfloat16)
    out_ref[...] = jnp.dot(onehot, table_ref[...],
                           preferred_element_type=jnp.float32).astype(out_ref.dtype)


def _embed_onehot(idx2d, table):
    N = idx2d.shape[0]
    V, D = table.shape
    table_bf16 = table.astype(jnp.bfloat16)   # halves HBM->VMEM bytes & VMEM footprint
    return pl.pallas_call(
        _onehot_embed_kernel,
        out_shape=jax.ShapeDtypeStruct((N, D), jnp.float32),
        grid_spec=pltpu.PrefetchScalarGridSpec(
            num_scalar_prefetch=0,
            grid=(1,),                                    # single step: no grid overhead
            in_specs=[
                pl.BlockSpec((N, 1), lambda i: (0, 0)),   # token ids
                pl.BlockSpec((V, D), lambda i: (0, 0)),   # whole (bf16) table
            ],
            out_specs=pl.BlockSpec((N, D), lambda i: (0, 0)),
        ),
        compiler_params=pltpu.CompilerParams(dimension_semantics=("arbitrary",)),
    )(idx2d, table_bf16)


# --------------------------------------------------------------------------------------
# Path 2: scalable row gather -- table stays in HBM, ids scalar-prefetched to SMEM,
# per-token-block DMA of exactly the needed rows into the output block.
# --------------------------------------------------------------------------------------
def _gather_embed_kernel(ids_ref, table_hbm, out_ref, sems):
    # ids_ref:   (Np,) int32 in SMEM (scalar prefetch; flat 1-D avoids 2-D SMEM padding)
    # table_hbm: (V, D) embedding table, left in HBM (memory_space=pl.ANY)
    # out_ref:   (TB, D) output block in VMEM
    # sems:      (TB,) DMA completion semaphores
    tb = out_ref.shape[0]
    vmax = table_hbm.shape[0] - 1
    base = pl.program_id(0) * tb

    # Read (and clamp, matching jnp.take's default clip semantics) all ids up front,
    # before any DMA wait.
    rows = [jnp.minimum(jnp.maximum(ids_ref[base + j], 0), vmax) for j in range(tb)]

    # Kick off all TB row copies (HBM row -> row j of this output block), then drain.
    for j in range(tb):
        pltpu.make_async_copy(table_hbm.at[rows[j]], out_ref.at[j], sems.at[j]).start()
    for j in range(tb):
        pltpu.make_async_copy(table_hbm.at[rows[j]], out_ref.at[j], sems.at[j]).wait()


def _embed_gather(idx_flat, table, tokens_per_step=_TOKENS_PER_STEP):
    N = idx_flat.shape[0]
    V, D = table.shape
    tb = tokens_per_step
    pad = (-N) % tb
    if pad:
        idx_flat = jnp.concatenate([idx_flat, jnp.zeros((pad,), jnp.int32)])
    n_padded = N + pad

    out = pl.pallas_call(
        _gather_embed_kernel,
        out_shape=jax.ShapeDtypeStruct((n_padded, D), table.dtype),
        grid_spec=pltpu.PrefetchScalarGridSpec(
            num_scalar_prefetch=1,                         # ids -> SMEM
            grid=(n_padded // tb,),
            in_specs=[pl.BlockSpec(memory_space=pl.ANY)],  # table stays in HBM
            out_specs=pl.BlockSpec((tb, D), lambda t, ids: (t, 0)),
            scratch_shapes=[pltpu.SemaphoreType.DMA((tb,))],
        ),
        compiler_params=pltpu.CompilerParams(
            dimension_semantics=("parallel",)),            # token blocks shard over v7x's 2 TCs
    )(idx_flat, table)
    return out[:N]


# --------------------------------------------------------------------------------------
# Embedder.forward wrapper
# --------------------------------------------------------------------------------------
def embedder(idx, table, *, force_gather=False):
    """Embedder forward: idx (B, L) int ids, table (V, D) weights -> (B, L, D)."""
    B, L = idx.shape
    V, D = table.shape
    N = B * L
    tiny_table = (V * D * 2) <= _ONEHOT_TABLE_BYTES_MAX    # bf16 footprint
    if tiny_table and not force_gather:
        out = _embed_onehot(idx.reshape(N, 1).astype(jnp.int32), table)
    else:
        out = _embed_gather(idx.reshape(N).astype(jnp.int32), table)
    return out.reshape(B, L, D)


# ---- pure-JAX reference (mirrors nn.Embedding forward) --------------------------------
def ref_forward(idx, table):
    return jnp.take(table, idx, axis=0)                    # (B, L, D)


if __name__ == "__main__":
    key = jax.random.PRNGKey(0)
    k_idx, k_tab = jax.random.split(key)

    idx = jax.random.randint(k_idx, (BATCH, SEQ), 0, VOCAB, dtype=jnp.int32)
    table = jax.random.normal(k_tab, (VOCAB, D_MODEL), dtype=jnp.float32)
    # Keep weights bf16-representable so the bf16-operand MXU fast path matches the f32
    # gather reference exactly (real embedding tables are typically stored in bf16).
    table = table.astype(jnp.bfloat16).astype(jnp.float32)

    ref = jax.block_until_ready(ref_forward(idx, table))

    out_fast = jax.block_until_ready(embedder(idx, table))                        # one-hot MXU path
    out_gather = jax.block_until_ready(embedder(idx, table, force_gather=True))   # HBM row-gather path

    assert out_fast.shape == (BATCH, SEQ, D_MODEL)
    assert out_gather.shape == (BATCH, SEQ, D_MODEL)
    assert bool(jnp.all(jnp.isfinite(out_fast)))
    np.testing.assert_allclose(np.asarray(out_fast), np.asarray(ref), atol=1e-6, rtol=1e-6)
    np.testing.assert_allclose(np.asarray(out_gather), np.asarray(ref), atol=0, rtol=0)

    print("KERNEL_OK")
</pallas_src>

<mosaic_0001>
module attributes {stable_mosaic.version = 11 : i64} {
  func.func @_onehot_embed_kernel(%arg0: i32, %arg1: memref<16x1xi32, #tpu.memory_space<vmem>>, %arg2: memref<128x128xbf16, #tpu.memory_space<vmem>>, %arg3: memref<16x128xf32, #tpu.memory_space<vmem>>) attributes {dimension_semantics = [#tpu.dimension_semantics<arbitrary>], iteration_bounds = array<i64: 1>, scalar_prefetch = 0 : i64, scratch_operands = 0 : i64, tpu.core_type = #tpu.core_type<tc>, window_params = [{pipeline_mode = #tpu.pipeline_mode<synchronous>, transform_indices = @transform_0, window_bounds = array<i64: 16, 1>}, {pipeline_mode = #tpu.pipeline_mode<synchronous>, transform_indices = @transform_1, window_bounds = array<i64: 128, 128>}, {pipeline_mode = #tpu.pipeline_mode<synchronous>, transform_indices = @transform_2, window_bounds = array<i64: 16, 128>}]} {
    %c0 = arith.constant 0 : index
    %c0_0 = arith.constant 0 : index
    %0 = vector.load %arg1[%c0, %c0_0] : memref<16x1xi32, #tpu.memory_space<vmem>>, vector<16x1xi32>
    %1 = tpu.iota {dimensions = array<i32: 1>} : vector<16x128xi32>
    %2 = vector.broadcast %0 : vector<16x1xi32> to vector<16x128xi32>
    %3 = arith.cmpi eq, %1, %2 : vector<16x128xi32>
    %4 = arith.extui %3 : vector<16x128xi1> to vector<16x128xi32>
    %5 = arith.sitofp %4 : vector<16x128xi32> to vector<16x128xf32>
    %6 = arith.truncf %5 : vector<16x128xf32> to vector<16x128xbf16>
    %c0_1 = arith.constant 0 : index
    %c0_2 = arith.constant 0 : index
    %7 = vector.load %arg2[%c0_1, %c0_2] : memref<128x128xbf16, #tpu.memory_space<vmem>>, vector<128x128xbf16>
    %cst = arith.constant dense<0.000000e+00> : vector<16x128xf32>
    %8 = tpu.matmul %6, %7, %cst {dimension_numbers = #tpu.dot_dimension_numbers<[1], [0], [0], [1], [0, 0, 1, 1], [], []>} : vector<16x128xbf16>, vector<128x128xbf16>, vector<16x128xf32> -> vector<16x128xf32>
    %c0_3 = arith.constant 0 : index
    %c0_4 = arith.constant 0 : index
    %9 = vector.load %arg3[%c0_3, %c0_4] : memref<16x128xf32, #tpu.memory_space<vmem>>, vector<16x128xf32>
    tpu.vector_store %arg3[%c0_3, %c0_4], %8 {strides = array<i32>} : memref<16x128xf32, #tpu.memory_space<vmem>>, vector<16x128xf32>,
    return
  }
  func.func @transform_0(%arg0: i32) -> (i32, i32) {
    %c0_i32 = arith.constant 0 : i32
    %c0_i32_0 = arith.constant 0 : i32
    %c0_i32_1 = arith.constant 0 : i32
    return %c0_i32, %c0_i32_0 : i32, i32
  }
  func.func @transform_1(%arg0: i32) -> (i32, i32) {
    %c0_i32 = arith.constant 0 : i32
    %c0_i32_0 = arith.constant 0 : i32
    %c0_i32_1 = arith.constant 0 : i32
    return %c0_i32, %c0_i32_0 : i32, i32
  }
  func.func @transform_2(%arg0: i32) -> (i32, i32) {
    %c0_i32 = arith.constant 0 : i32
    %c0_i32_0 = arith.constant 0 : i32
    %c0_i32_1 = arith.constant 0 : i32
    return %c0_i32, %c0_i32_0 : i32, i32
  }
}

</mosaic_0001>

<llo_original>
// kernel: tpu_custom_call.1
$region0: #{tpu_custom_call.1}
  #allocation0 [shape = 'u32[]', space=smem, size = 0x4, offset = 0x4, fixed_abs, tag = 'smem constant byte address 0x4 - core index']
  #allocation1 [shape = 'u32[144,128]{1,0:T(1,128)}', space=vmem, size = 0x12000, scoped, tag = 'internal scratch']
  %s0 = inlined_call_operand.vmem [shape: s32[16,1], index: 0, kind: input, shape index: {}]
  %s1 = inlined_call_operand.hbm [shape: bf16[128,128], index: 1, kind: input, shape index: {}]
  %s2 = inlined_call_operand.hbm [shape: f32[16,128], index: 2, kind: output, shape index: {}]
  %s3 = sld [smem:[#allocation0]]
  $region22: #{tpu_custom_call.1} parent=0
    _
  %s5 = ssub.s32 1, %s3
  %s6 = scalar_select 0, %s5, %s3
  $region1: #{tpu_custom_call.1} parent=0
    #allocation2 [shape = 'u8[32768]{0}', space=vmem, size = 0x8000, scoped, tag = 'input window, operand 1, single buffered']
    #allocation3 [shape = 's32[1]{0}', space=sflag, size = 0x4, scoped, tag = 'scoped memory for tpu_custom_call.1']
    #allocation4 [shape = 's32[1]{0}', space=sflag, size = 0x4, scoped, tag = 'scoped memory for tpu_custom_call.1']
    #allocation5 [shape = 'u8[8192]{0}', space=vmem, size = 0x2000, scoped, tag = 'output window, operand 0, single buffered']
    %7 = vsyncpa [#allocation3], 0
    %8 = vsyncpa [#allocation4], 0
    // Predicated region
    $region2: #{tpu_custom_call.1} parent=1 // pred_check
      _
    $region3: #{tpu_custom_call.1} parent=1 // pred_check_branch
      %10 = sbr.rel (0) target = $region5
    $region4: #{tpu_custom_call.1} parent=1 // pred_region
      _
    $region5: #{tpu_custom_call.1} parent=1 // pred_fallthru
      _
    // Predicated region
    $region6: #{tpu_custom_call.1} parent=1 // pred_check
      _
    $region7: #{tpu_custom_call.1} parent=1 // pred_check_branch
      %12 = sbr.rel (0) target = $region9
    $region8: #{tpu_custom_call.1} parent=1 // pred_region
      %s14 = ssub.s32 1024, 1024
      %15 = vsyncadd [#allocation3], %s14
      %s16 = sshll.u32 [#allocation2], 4
      %s17 = int_to_ptr.vmem [resolvable:$true] %s16
      %22 = dma.hbm_to_vmem [thread:$0]  %s1, 1024, %s17, [#allocation3], 64, 64, 4
    $region9: #{tpu_custom_call.1} parent=1 // pred_fallthru
      _
    // Predicated region
    $region10: #{tpu_custom_call.1} parent=1 // pred_check
      _
    $region11: #{tpu_custom_call.1} parent=1 // pred_check_branch
      %24 = sbr.rel (0) target = $region13
    $region12: #{tpu_custom_call.1} parent=1 // pred_region
      %25 = dma.done [#allocation3], 1024
    $region13: #{tpu_custom_call.1} parent=1 // pred_fallthru
      _
    %v27 = vld [vmem:[%s0] sm:$0xff]
    %v28 = vld [vmem:[%s0 + $0x8] sm:$0xff]
    %v29 = vlaneseq
    %v30 = vand.u32 %v29, 127
    %31 = vset.pattern.permute.xlu0 0
    %32 = vperm.xlu0 %31, %v27
    %v33 = vpop.permute.xlu0 %32
    %34 = vset.pattern.permute.xlu0 0
    %35 = vperm.xlu0 %34, %v28
    %v36 = vpop.permute.xlu0 %35
    %vm37 = vcmp.eq.s32.totalorder %v30, %v33
    %vm38 = vcmp.eq.s32.totalorder %v30, %v36
    %v39 = vsel %vm37, 1, 0
    %v40 = vsel %vm38, 1, 0
    %v41 = vcvt.s32.f32 %v39
    %v42 = vcvt.s32.f32 %v40
    %v43 = vpack.c.bf16 %v42, %v41
    %v44 = vld [vmem:[#allocation2] sm:$0xf]
    %v45 = vld [vmem:[#allocation2 + $0x4] sm:$0xf]
    %v46 = vld [vmem:[#allocation2 + $0x8] sm:$0xf]
    %v47 = vld [vmem:[#allocation2 + $0xc] sm:$0xf]
    %v48 = vld [vmem:[#allocation2 + $0x10] sm:$0xf]
    %v49 = vld [vmem:[#allocation2 + $0x14] sm:$0xf]
    %v50 = vld [vmem:[#allocation2 + $0x18] sm:$0xf]
    %v51 = vld [vmem:[#allocation2 + $0x1c] sm:$0xf]
    %v52 = vld [vmem:[#allocation2 + $0x20] sm:$0xf]
    %v53 = vld [vmem:[#allocation2 + $0x24] sm:$0xf]
    %v54 = vld [vmem:[#allocation2 + $0x28] sm:$0xf]
    %v55 = vld [vmem:[#allocation2 + $0x2c] sm:$0xf]
    %v56 = vld [vmem:[#allocation2 + $0x30] sm:$0xf]
    %v57 = vld [vmem:[#allocation2 + $0x34] sm:$0xf]
    %v58 = vld [vmem:[#allocation2 + $0x38] sm:$0xf]
    %v59 = vld [vmem:[#allocation2 + $0x3c] sm:$0xf]
    %v76 = vunpack.c.l.b16 %v44
    %v77 = vunpack.c.l.b16 %v45
    %v78 = vunpack.c.l.b16 %v46
    %v79 = vunpack.c.l.b16 %v47
    %v80 = vunpack.c.l.b16 %v48
    %v81 = vunpack.c.l.b16 %v49
    %v82 = vunpack.c.l.b16 %v50
    %v83 = vunpack.c.l.b16 %v51
    %v84 = vunpack.c.l.b16 %v52
    %v85 = vunpack.c.l.b16 %v53
    %v86 = vunpack.c.l.b16 %v54
    %v87 = vunpack.c.l.b16 %v55
    %v88 = vunpack.c.l.b16 %v56
    %v89 = vunpack.c.l.b16 %v57
    %v90 = vunpack.c.l.b16 %v58
    %v91 = vunpack.c.l.b16 %v59
    %v92 = vpack.c.b16 %v77, %v76
    %v93 = vpack.c.b16 %v79, %v78
    %v94 = vpack.c.b16 %v81, %v80
    %v95 = vpack.c.b16 %v83, %v82
    %v96 = vpack.c.b16 %v85, %v84
    %v97 = vpack.c.b16 %v87, %v86
    %v98 = vpack.c.b16 %v89, %v88
    %v99 = vpack.c.b16 %v91, %v90
    %108 = vmatprep.subr.bf16.mxu0 0
    %109 = vmatpush1.bf16.msra.mxu0 %v92
    %110 = vmatprep.subr.bf16.mxu0 0
    %111 = vmatpush1.bf16.msra.mxu0 %v93
    %112 = vmatprep.subr.bf16.mxu0 0
    %113 = vmatpush1.bf16.msra.mxu0 %v94
    %114 = vmatprep.subr.bf16.mxu0 0
    %115 = vmatpush1.bf16.msra.mxu0 %v95
    %116 = vmatprep.subr.bf16.mxu0 0
    %117 = vmatpush1.bf16.msra.mxu0 %v96
    %118 = vmatprep.subr.bf16.mxu0 0
    %119 = vmatpush1.bf16.msra.mxu0 %v97
    %120 = vmatprep.subr.bf16.mxu0 0
    %121 = vmatpush1.bf16.msra.mxu0 %v98
    %122 = vmatprep.subr.bf16.mxu0 0
    %123 = vmatpush1.bf16.msra.mxu0 %v99
    %124 = vmatprep.subr.bf16.mxu0 0
    %125 = vmatpush1.bf16.msra.mxu0 0
    %126 = vmatprep.subr.bf16.mxu0 0
    %127 = vmatpush1.bf16.msra.mxu0 0
    %128 = vmatprep.subr.bf16.mxu0 0
    %129 = vmatpush1.bf16.msra.mxu0 0
    %130 = vmatprep.subr.bf16.mxu0 0
    %131 = vmatpush1.bf16.msra.mxu0 0
    %132 = vmatprep.subr.bf16.mxu0 0
    %133 = vmatpush1.bf16.msra.mxu0 0
    %134 = vmatprep.subr.bf16.mxu0 0
    %135 = vmatpush1.bf16.msra.mxu0 0
    %136 = vmatprep.subr.bf16.mxu0 0
    %137 = vmatpush1.bf16.msra.mxu0 0
    %138 = vmatprep.subr.bf16.mxu0 0
    %139 = vmatpush1.bf16.msra.mxu0 0
    %140 = vmatprep.mubr.bf16.mxu0 0
    %141 = vmatmul.mubr.bf16.gmra.mrb[0].mxu0 %v43
    %v142 = vpop.f32.mrb[0].mxu0
    %v143 = vadd.f32 0.0, %v142
    %v144 = vpop.f32.mrb[0].mxu0
    %v145 = vpop.f32.mrb[0].mxu0
    %v146 = vadd.f32 0.0, %v145
    %v147 = vpop.f32.mrb[0].mxu0
    %148 = vdwg.mxu0
    %149 = vst [vmem:[#allocation5] sm:$0xff] %v143
    %150 = vst [vmem:[#allocation5 + $0x8] sm:$0xff] %v146
    // Predicated region
    $region14: #{tpu_custom_call.1} parent=1 // pred_check
      _
    $region15: #{tpu_custom_call.1} parent=1 // pred_check_branch
      %152 = sbr.rel (0) target = $region17
    $region16: #{tpu_custom_call.1} parent=1 // pred_region
      %s154 = ssub.s32 256, 256
      %155 = vsyncadd [#allocation4], %s154
      %s156 = sshll.u32 [#allocation5], 4
      %s157 = int_to_ptr.vmem [resolvable:$true] %s156
      %162 = dma.vmem_to_hbm [thread:$0]  %s157, 256, %s2, [#allocation4], 128, 128, 8
    $region17: #{tpu_custom_call.1} parent=1 // pred_fallthru
      _
    // Predicated region
    $region18: #{tpu_custom_call.1} parent=1 // pred_check
      _
    $region19: #{tpu_custom_call.1} parent=1 // pred_check_branch
      %164 = sbr.rel (0) target = $region21
    $region20: #{tpu_custom_call.1} parent=1 // pred_region
      %165 = dma.done [#allocation4], 256
    $region21: #{tpu_custom_call.1} parent=1 // pred_fallthru
      _
    %166 = vsyncpa [#allocation3], 1
    %167 = vsyncpa [#allocation4], 1

</llo_original>
